<compile_context>
chip_gen: v6e
topology: v6e:2x2x1
jax: 0.10.0
libtpu: 0.0.40
codegen_flags: <defaults>
</compile_context>

<pallas_src>
import functools

import jax
import jax.numpy as jnp
from jax.experimental import pallas as pl
from jax.experimental.pallas import tpu as pltpu


def lstm_fc_kernel(x_ref, wih_ref, whh_ref, wfc_ref, bfc_ref, out_ref, xp_ref, *,
                   seq_len, batch, hidden):
    """x_ref:   (T*Bp, F)   time-major, batch-padded input
       wih_ref: (F, G4)     input->gate weights, gates packed [i,f,g,o] along lanes
       whh_ref: (H, G4)     hidden->gate weights, same lane packing
       wfc_ref: (H, Op)     fc weights (transposed, output padded to Op)
       bfc_ref: (1, Op)     fc bias
       out_ref: (Bp, Op)
       xp_ref:  (T*Bp, G4)  VMEM scratch holding the hoisted input projection."""
    # Hoisted input projection for ALL timesteps in one MXU call, parked in VMEM
    # scratch (not carried as live vregs across the unrolled recurrence).
    xp_ref[...] = jnp.dot(x_ref[...], wih_ref[...],
                          preferred_element_type=jnp.float32)      # (T*Bp, G4)

    h = jnp.zeros((batch, hidden), jnp.float32)
    c = jnp.zeros((batch, hidden), jnp.float32)

    # Statically unrolled serial recurrence; per step the gates are ONE (Bp, 128)
    # lane tile (H=32 -> 4H=128).  w_hh is read straight from the ref each step.
    for t in range(seq_len):
        gates = xp_ref[t * batch:(t + 1) * batch, :] + jnp.dot(
            h, whh_ref[...], preferred_element_type=jnp.float32)   # (Bp, G4)
        sg = jax.nn.sigmoid(gates)                   # single EUP pass for i, f, o
        i_g = sg[:, 0 * hidden:1 * hidden]
        f_g = sg[:, 1 * hidden:2 * hidden]
        o_g = sg[:, 3 * hidden:4 * hidden]
        g_g = jnp.tanh(gates[:, 2 * hidden:3 * hidden])            # (Bp, H) EUP
        c = f_g * c + i_g * g_g
        h = o_g * jnp.tanh(c)

    # fc head on the last hidden state; (Bp, Op) lane/sublane-dense store.
    out_ref[...] = (jnp.dot(h, wfc_ref[...], preferred_element_type=jnp.float32)
                    + bfc_ref[...])


def make_lstm_net(w_ih, w_hh, w_fc, b_fc):
    """One-time weight packing (hoisted out of the per-call path) + jitted forward.

       w_ih: (4H, F); w_hh: (4H, H); w_fc: (O, H); b_fc: (O,)."""
    LANE, SUB = 128, 8
    f32 = jnp.float32

    H = w_hh.shape[1]
    O = w_fc.shape[0]
    G4 = max(((4 * H + LANE - 1) // LANE) * LANE, LANE)   # packed gate width (=128 for H=32)
    Op = max(((O + LANE - 1) // LANE) * LANE, LANE)       # padded fc output width

    # Gates keep PyTorch [i, f, g, o] order, concatenated along the lane axis.
    wih_p = jnp.pad(jnp.transpose(w_ih.astype(f32)), ((0, 0), (0, G4 - 4 * H)))  # (F, G4)
    whh_p = jnp.pad(jnp.transpose(w_hh.astype(f32)), ((0, 0), (0, G4 - 4 * H)))  # (H, G4)
    wfc_p = jnp.pad(jnp.transpose(w_fc.astype(f32)), ((0, 0), (0, Op - O)))      # (H, Op)
    bfc_p = jnp.pad(b_fc.astype(f32), (0, Op - O)).reshape(1, Op)                # (1, Op)

    vmem = pl.BlockSpec(memory_space=pltpu.MemorySpace.VMEM)

    @jax.jit
    def forward(x_btf):
        B, T, F = x_btf.shape
        Bp = max(((B + SUB - 1) // SUB) * SUB, SUB)

        # x: (B,T,F) -> time-major, batch padded to Bp (padded rows are exactly 0,
        # so their h/c stay 0 through the recurrence), flattened to (T*Bp, F).
        x_tbf = jnp.transpose(x_btf.astype(f32), (1, 0, 2))
        x_tbf = jnp.pad(x_tbf, ((0, 0), (0, Bp - B), (0, 0)))
        x2d = x_tbf.reshape(T * Bp, F)

        out_p = pl.pallas_call(
            functools.partial(lstm_fc_kernel, seq_len=T, batch=Bp, hidden=H),
            out_shape=jax.ShapeDtypeStruct((Bp, Op), f32),
            in_specs=[vmem] * 5,
            out_specs=vmem,
            scratch_shapes=[pltpu.VMEM((T * Bp, G4), f32)],
        )(x2d, wih_p, whh_p, wfc_p, bfc_p)

        return out_p[:B, :O]

    return forward


def lstm_net_reference(x_btf, w_ih, w_hh, w_fc, b_fc):
    """Pure-JAX reference of the PyTorch forward, for a correctness check."""
    B, T, F = x_btf.shape
    H = w_hh.shape[1]
    h = jnp.zeros((B, H), jnp.float32)
    c = jnp.zeros((B, H), jnp.float32)
    for t in range(T):
        x_t = x_btf[:, t, :]
        gates = x_t @ w_ih.T + h @ w_hh.T
        i = jax.nn.sigmoid(gates[:, 0 * H:1 * H])
        f = jax.nn.sigmoid(gates[:, 1 * H:2 * H])
        g = jnp.tanh(gates[:, 2 * H:3 * H])
        o = jax.nn.sigmoid(gates[:, 3 * H:4 * H])
        c = f * c + i * g
        h = o * jnp.tanh(c)
    return h @ w_fc.T + b_fc


if __name__ == "__main__":
    # Module hyperparameters (n_hidden -> 32, single layer; n_output=20).
    B, T, F = 2, 8, 4          # batch, sequence length, n_features
    H, O = 32, 20              # hidden_dim, n_output

    key = jax.random.PRNGKey(0)
    k_x, k_ih, k_hh, k_fc, k_b = jax.random.split(key, 5)

    # Deterministic PyTorch-style uniform(-1/sqrt(H), 1/sqrt(H)) init.
    s = 1.0 / jnp.sqrt(jnp.float32(H))
    x = jax.random.normal(k_x, (B, T, F), jnp.float32)
    w_ih = jax.random.uniform(k_ih, (4 * H, F), jnp.float32, -s, s)
    w_hh = jax.random.uniform(k_hh, (4 * H, H), jnp.float32, -s, s)
    w_fc = jax.random.uniform(k_fc, (O, H), jnp.float32, -s, s)
    b_fc = jax.random.uniform(k_b, (O,), jnp.float32, -s, s)

    forward = make_lstm_net(w_ih, w_hh, w_fc, b_fc)   # one-time weight packing
    out = jax.block_until_ready(forward(x))

    ref = lstm_net_reference(x, w_ih, w_hh, w_fc, b_fc)
    assert out.shape == (B, O)
    assert jnp.allclose(out, ref, atol=1e-4, rtol=1e-4)

    print("KERNEL_OK")
</pallas_src>

<mosaic_0001>
module attributes {stable_mosaic.version = 11 : i64} {
  func.func @lstm_fc_kernel(%arg0: memref<64x4xf32, #tpu.memory_space<vmem>>, %arg1: memref<4x128xf32, #tpu.memory_space<vmem>>, %arg2: memref<32x128xf32, #tpu.memory_space<vmem>>, %arg3: memref<32x128xf32, #tpu.memory_space<vmem>>, %arg4: memref<1x128xf32, #tpu.memory_space<vmem>>, %arg5: memref<8x128xf32, #tpu.memory_space<vmem>>, %arg6: memref<64x128xf32, #tpu.memory_space<vmem>>) attributes {dimension_semantics = [], scalar_prefetch = 0 : i64, scratch_operands = 1 : i64, tpu.core_type = #tpu.core_type<tc>} {
    %c0 = arith.constant 0 : index
    %c0_0 = arith.constant 0 : index
    %0 = vector.load %arg0[%c0, %c0_0] : memref<64x4xf32, #tpu.memory_space<vmem>>, vector<64x4xf32>
    %c0_1 = arith.constant 0 : index
    %c0_2 = arith.constant 0 : index
    %1 = vector.load %arg1[%c0_1, %c0_2] : memref<4x128xf32, #tpu.memory_space<vmem>>, vector<4x128xf32>
    %cst = arith.constant dense<0.000000e+00> : vector<64x128xf32>
    %2 = tpu.matmul %0, %1, %cst {dimension_numbers = #tpu.dot_dimension_numbers<[1], [0], [0], [1], [0, 0, 1, 1], [], []>} : vector<64x4xf32>, vector<4x128xf32>, vector<64x128xf32> -> vector<64x128xf32>
    %c0_3 = arith.constant 0 : index
    %c0_4 = arith.constant 0 : index
    %3 = vector.load %arg6[%c0_3, %c0_4] : memref<64x128xf32, #tpu.memory_space<vmem>>, vector<64x128xf32>
    tpu.vector_store %arg6[%c0_3, %c0_4], %2 {strides = array<i32>} : memref<64x128xf32, #tpu.memory_space<vmem>>, vector<64x128xf32>,
    %cst_5 = arith.constant 0.000000e+00 : f32
    %4 = vector.broadcast %cst_5 : f32 to vector<8x32xf32>
    %cst_6 = arith.constant 0.000000e+00 : f32
    %5 = vector.broadcast %cst_6 : f32 to vector<8x32xf32>
    %c0_7 = arith.constant 0 : index
    %c0_8 = arith.constant 0 : index
    %6 = vector.load %arg6[%c0_7, %c0_8] : memref<64x128xf32, #tpu.memory_space<vmem>>, vector<8x128xf32>
    %c0_9 = arith.constant 0 : index
    %c0_10 = arith.constant 0 : index
    %7 = vector.load %arg2[%c0_9, %c0_10] : memref<32x128xf32, #tpu.memory_space<vmem>>, vector<32x128xf32>
    %cst_11 = arith.constant dense<0.000000e+00> : vector<8x128xf32>
    %8 = tpu.matmul %4, %7, %cst_11 {dimension_numbers = #tpu.dot_dimension_numbers<[1], [0], [0], [1], [0, 0, 1, 1], [], []>} : vector<8x32xf32>, vector<32x128xf32>, vector<8x128xf32> -> vector<8x128xf32>
    %9 = arith.addf %6, %8 : vector<8x128xf32>
    %10 = arith.negf %9 : vector<8x128xf32>
    %11 = math.exp %10 : vector<8x128xf32>
    %cst_12 = arith.constant 1.000000e+00 : f32
    %12 = vector.broadcast %cst_12 : f32 to vector<8x128xf32>
    %13 = arith.addf %12, %11 : vector<8x128xf32>
    %14 = arith.divf %12, %13 : vector<8x128xf32>
    %15 = vector.extract_strided_slice %14 {offsets = [0, 0], sizes = [8, 32], strides = [1, 1]} : vector<8x128xf32> to vector<8x32xf32>
    %16 = vector.extract_strided_slice %14 {offsets = [0, 32], sizes = [8, 32], strides = [1, 1]} : vector<8x128xf32> to vector<8x32xf32>
    %17 = vector.extract_strided_slice %14 {offsets = [0, 96], sizes = [8, 32], strides = [1, 1]} : vector<8x128xf32> to vector<8x32xf32>
    %18 = vector.extract_strided_slice %9 {offsets = [0, 64], sizes = [8, 32], strides = [1, 1]} : vector<8x128xf32> to vector<8x32xf32>
    %19 = math.tanh %18 : vector<8x32xf32>
    %20 = arith.mulf %16, %5 : vector<8x32xf32>
    %21 = arith.mulf %15, %19 : vector<8x32xf32>
    %22 = arith.addf %20, %21 : vector<8x32xf32>
    %23 = math.tanh %22 : vector<8x32xf32>
    %24 = arith.mulf %17, %23 : vector<8x32xf32>
    %c8 = arith.constant 8 : index
    %c0_13 = arith.constant 0 : index
    %25 = vector.load %arg6[%c8, %c0_13] : memref<64x128xf32, #tpu.memory_space<vmem>>, vector<8x128xf32>
    %c0_14 = arith.constant 0 : index
    %c0_15 = arith.constant 0 : index
    %26 = vector.load %arg2[%c0_14, %c0_15] : memref<32x128xf32, #tpu.memory_space<vmem>>, vector<32x128xf32>
    %cst_16 = arith.constant dense<0.000000e+00> : vector<8x128xf32>
    %27 = tpu.matmul %24, %26, %cst_16 {dimension_numbers = #tpu.dot_dimension_numbers<[1], [0], [0], [1], [0, 0, 1, 1], [], []>} : vector<8x32xf32>, vector<32x128xf32>, vector<8x128xf32> -> vector<8x128xf32>
    %28 = arith.addf %25, %27 : vector<8x128xf32>
    %29 = arith.negf %28 : vector<8x128xf32>
    %30 = math.exp %29 : vector<8x128xf32>
    %cst_17 = arith.constant 1.000000e+00 : f32
    %31 = vector.broadcast %cst_17 : f32 to vector<8x128xf32>
    %32 = arith.addf %31, %30 : vector<8x128xf32>
    %33 = arith.divf %31, %32 : vector<8x128xf32>
    %34 = vector.extract_strided_slice %33 {offsets = [0, 0], sizes = [8, 32], strides = [1, 1]} : vector<8x128xf32> to vector<8x32xf32>
    %35 = vector.extract_strided_slice %33 {offsets = [0, 32], sizes = [8, 32], strides = [1, 1]} : vector<8x128xf32> to vector<8x32xf32>
    %36 = vector.extract_strided_slice %33 {offsets = [0, 96], sizes = [8, 32], strides = [1, 1]} : vector<8x128xf32> to vector<8x32xf32>
    %37 = vector.extract_strided_slice %28 {offsets = [0, 64], sizes = [8, 32], strides = [1, 1]} : vector<8x128xf32> to vector<8x32xf32>
    %38 = math.tanh %37 : vector<8x32xf32>
    %39 = arith.mulf %35, %22 : vector<8x32xf32>
    %40 = arith.mulf %34, %38 : vector<8x32xf32>
    %41 = arith.addf %39, %40 : vector<8x32xf32>
    %42 = math.tanh %41 : vector<8x32xf32>
    %43 = arith.mulf %36, %42 : vector<8x32xf32>
    %c16 = arith.constant 16 : index
    %c0_18 = arith.constant 0 : index
    %44 = vector.load %arg6[%c16, %c0_18] : memref<64x128xf32, #tpu.memory_space<vmem>>, vector<8x128xf32>
    %c0_19 = arith.constant 0 : index
    %c0_20 = arith.constant 0 : index
    %45 = vector.load %arg2[%c0_19, %c0_20] : memref<32x128xf32, #tpu.memory_space<vmem>>, vector<32x128xf32>
    %cst_21 = arith.constant dense<0.000000e+00> : vector<8x128xf32>
    %46 = tpu.matmul %43, %45, %cst_21 {dimension_numbers = #tpu.dot_dimension_numbers<[1], [0], [0], [1], [0, 0, 1, 1], [], []>} : vector<8x32xf32>, vector<32x128xf32>, vector<8x128xf32> -> vector<8x128xf32>
    %47 = arith.addf %44, %46 : vector<8x128xf32>
    %48 = arith.negf %47 : vector<8x128xf32>
    %49 = math.exp %48 : vector<8x128xf32>
    %cst_22 = arith.constant 1.000000e+00 : f32
    %50 = vector.broadcast %cst_22 : f32 to vector<8x128xf32>
    %51 = arith.addf %50, %49 : vector<8x128xf32>
    %52 = arith.divf %50, %51 : vector<8x128xf32>
    %53 = vector.extract_strided_slice %52 {offsets = [0, 0], sizes = [8, 32], strides = [1, 1]} : vector<8x128xf32> to vector<8x32xf32>
    %54 = vector.extract_strided_slice %52 {offsets = [0, 32], sizes = [8, 32], strides = [1, 1]} : vector<8x128xf32> to vector<8x32xf32>
    %55 = vector.extract_strided_slice %52 {offsets = [0, 96], sizes = [8, 32], strides = [1, 1]} : vector<8x128xf32> to vector<8x32xf32>
    %56 = vector.extract_strided_slice %47 {offsets = [0, 64], sizes = [8, 32], strides = [1, 1]} : vector<8x128xf32> to vector<8x32xf32>
    %57 = math.tanh %56 : vector<8x32xf32>
    %58 = arith.mulf %54, %41 : vector<8x32xf32>
    %59 = arith.mulf %53, %57 : vector<8x32xf32>
    %60 = arith.addf %58, %59 : vector<8x32xf32>
    %61 = math.tanh %60 : vector<8x32xf32>
    %62 = arith.mulf %55, %61 : vector<8x32xf32>
    %c24 = arith.constant 24 : index
    %c0_23 = arith.constant 0 : index
    %63 = vector.load %arg6[%c24, %c0_23] : memref<64x128xf32, #tpu.memory_space<vmem>>, vector<8x128xf32>
    %c0_24 = arith.constant 0 : index
    %c0_25 = arith.constant 0 : index
    %64 = vector.load %arg2[%c0_24, %c0_25] : memref<32x128xf32, #tpu.memory_space<vmem>>, vector<32x128xf32>
    %cst_26 = arith.constant dense<0.000000e+00> : vector<8x128xf32>
    %65 = tpu.matmul %62, %64, %cst_26 {dimension_numbers = #tpu.dot_dimension_numbers<[1], [0], [0], [1], [0, 0, 1, 1], [], []>} : vector<8x32xf32>, vector<32x128xf32>, vector<8x128xf32> -> vector<8x128xf32>
    %66 = arith.addf %63, %65 : vector<8x128xf32>
    %67 = arith.negf %66 : vector<8x128xf32>
    %68 = math.exp %67 : vector<8x128xf32>
    %cst_27 = arith.constant 1.000000e+00 : f32
    %69 = vector.broadcast %cst_27 : f32 to vector<8x128xf32>
    %70 = arith.addf %69, %68 : vector<8x128xf32>
    %71 = arith.divf %69, %70 : vector<8x128xf32>
    %72 = vector.extract_strided_slice %71 {offsets = [0, 0], sizes = [8, 32], strides = [1, 1]} : vector<8x128xf32> to vector<8x32xf32>
    %73 = vector.extract_strided_slice %71 {offsets = [0, 32], sizes = [8, 32], strides = [1, 1]} : vector<8x128xf32> to vector<8x32xf32>
    %74 = vector.extract_strided_slice %71 {offsets = [0, 96], sizes = [8, 32], strides = [1, 1]} : vector<8x128xf32> to vector<8x32xf32>
    %75 = vector.extract_strided_slice %66 {offsets = [0, 64], sizes = [8, 32], strides = [1, 1]} : vector<8x128xf32> to vector<8x32xf32>
    %76 = math.tanh %75 : vector<8x32xf32>
    %77 = arith.mulf %73, %60 : vector<8x32xf32>
    %78 = arith.mulf %72, %76 : vector<8x32xf32>
    %79 = arith.addf %77, %78 : vector<8x32xf32>
    %80 = math.tanh %79 : vector<8x32xf32>
    %81 = arith.mulf %74, %80 : vector<8x32xf32>
    %c32 = arith.constant 32 : index
    %c0_28 = arith.constant 0 : index
    %82 = vector.load %arg6[%c32, %c0_28] : memref<64x128xf32, #tpu.memory_space<vmem>>, vector<8x128xf32>
    %c0_29 = arith.constant 0 : index
    %c0_30 = arith.constant 0 : index
    %83 = vector.load %arg2[%c0_29, %c0_30] : memref<32x128xf32, #tpu.memory_space<vmem>>, vector<32x128xf32>
    %cst_31 = arith.constant dense<0.000000e+00> : vector<8x128xf32>
    %84 = tpu.matmul %81, %83, %cst_31 {dimension_numbers = #tpu.dot_dimension_numbers<[1], [0], [0], [1], [0, 0, 1, 1], [], []>} : vector<8x32xf32>, vector<32x128xf32>, vector<8x128xf32> -> vector<8x128xf32>
    %85 = arith.addf %82, %84 : vector<8x128xf32>
    %86 = arith.negf %85 : vector<8x128xf32>
    %87 = math.exp %86 : vector<8x128xf32>
    %cst_32 = arith.constant 1.000000e+00 : f32
    %88 = vector.broadcast %cst_32 : f32 to vector<8x128xf32>
    %89 = arith.addf %88, %87 : vector<8x128xf32>
    %90 = arith.divf %88, %89 : vector<8x128xf32>
    %91 = vector.extract_strided_slice %90 {offsets = [0, 0], sizes = [8, 32], strides = [1, 1]} : vector<8x128xf32> to vector<8x32xf32>
    %92 = vector.extract_strided_slice %90 {offsets = [0, 32], sizes = [8, 32], strides = [1, 1]} : vector<8x128xf32> to vector<8x32xf32>
    %93 = vector.extract_strided_slice %90 {offsets = [0, 96], sizes = [8, 32], strides = [1, 1]} : vector<8x128xf32> to vector<8x32xf32>
    %94 = vector.extract_strided_slice %85 {offsets = [0, 64], sizes = [8, 32], strides = [1, 1]} : vector<8x128xf32> to vector<8x32xf32>
    %95 = math.tanh %94 : vector<8x32xf32>
    %96 = arith.mulf %92, %79 : vector<8x32xf32>
    %97 = arith.mulf %91, %95 : vector<8x32xf32>
    %98 = arith.addf %96, %97 : vector<8x32xf32>
    %99 = math.tanh %98 : vector<8x32xf32>
    %100 = arith.mulf %93, %99 : vector<8x32xf32>
    %c40 = arith.constant 40 : index
    %c0_33 = arith.constant 0 : index
    %101 = vector.load %arg6[%c40, %c0_33] : memref<64x128xf32, #tpu.memory_space<vmem>>, vector<8x128xf32>
    %c0_34 = arith.constant 0 : index
    %c0_35 = arith.constant 0 : index
    %102 = vector.load %arg2[%c0_34, %c0_35] : memref<32x128xf32, #tpu.memory_space<vmem>>, vector<32x128xf32>
    %cst_36 = arith.constant dense<0.000000e+00> : vector<8x128xf32>
    %103 = tpu.matmul %100, %102, %cst_36 {dimension_numbers = #tpu.dot_dimension_numbers<[1], [0], [0], [1], [0, 0, 1, 1], [], []>} : vector<8x32xf32>, vector<32x128xf32>, vector<8x128xf32> -> vector<8x128xf32>
    %104 = arith.addf %101, %103 : vector<8x128xf32>
    %105 = arith.negf %104 : vector<8x128xf32>
    %106 = math.exp %105 : vector<8x128xf32>
    %cst_37 = arith.constant 1.000000e+00 : f32
    %107 = vector.broadcast %cst_37 : f32 to vector<8x128xf32>
    %108 = arith.addf %107, %106 : vector<8x128xf32>
    %109 = arith.divf %107, %108 : vector<8x128xf32>
    %110 = vector.extract_strided_slice %109 {offsets = [0, 0], sizes = [8, 32], strides = [1, 1]} : vector<8x128xf32> to vector<8x32xf32>
    %111 = vector.extract_strided_slice %109 {offsets = [0, 32], sizes = [8, 32], strides = [1, 1]} : vector<8x128xf32> to vector<8x32xf32>
    %112 = vector.extract_strided_slice %109 {offsets = [0, 96], sizes = [8, 32], strides = [1, 1]} : vector<8x128xf32> to vector<8x32xf32>
    %113 = vector.extract_strided_slice %104 {offsets = [0, 64], sizes = [8, 32], strides = [1, 1]} : vector<8x128xf32> to vector<8x32xf32>
    %114 = math.tanh %113 : vector<8x32xf32>
    %115 = arith.mulf %111, %98 : vector<8x32xf32>
    %116 = arith.mulf %110, %114 : vector<8x32xf32>
    %117 = arith.addf %115, %116 : vector<8x32xf32>
    %118 = math.tanh %117 : vector<8x32xf32>
    %119 = arith.mulf %112, %118 : vector<8x32xf32>
    %c48 = arith.constant 48 : index
    %c0_38 = arith.constant 0 : index
    %120 = vector.load %arg6[%c48, %c0_38] : memref<64x128xf32, #tpu.memory_space<vmem>>, vector<8x128xf32>
    %c0_39 = arith.constant 0 : index
    %c0_40 = arith.constant 0 : index
    %121 = vector.load %arg2[%c0_39, %c0_40] : memref<32x128xf32, #tpu.memory_space<vmem>>, vector<32x128xf32>
    %cst_41 = arith.constant dense<0.000000e+00> : vector<8x128xf32>
    %122 = tpu.matmul %119, %121, %cst_41 {dimension_numbers = #tpu.dot_dimension_numbers<[1], [0], [0], [1], [0, 0, 1, 1], [], []>} : vector<8x32xf32>, vector<32x128xf32>, vector<8x128xf32> -> vector<8x128xf32>
    %123 = arith.addf %120, %122 : vector<8x128xf32>
    %124 = arith.negf %123 : vector<8x128xf32>
    %125 = math.exp %124 : vector<8x128xf32>
    %cst_42 = arith.constant 1.000000e+00 : f32
    %126 = vector.broadcast %cst_42 : f32 to vector<8x128xf32>
    %127 = arith.addf %126, %125 : vector<8x128xf32>
    %128 = arith.divf %126, %127 : vector<8x128xf32>
    %129 = vector.extract_strided_slice %128 {offsets = [0, 0], sizes = [8, 32], strides = [1, 1]} : vector<8x128xf32> to vector<8x32xf32>
    %130 = vector.extract_strided_slice %128 {offsets = [0, 32], sizes = [8, 32], strides = [1, 1]} : vector<8x128xf32> to vector<8x32xf32>
    %131 = vector.extract_strided_slice %128 {offsets = [0, 96], sizes = [8, 32], strides = [1, 1]} : vector<8x128xf32> to vector<8x32xf32>
    %132 = vector.extract_strided_slice %123 {offsets = [0, 64], sizes = [8, 32], strides = [1, 1]} : vector<8x128xf32> to vector<8x32xf32>
    %133 = math.tanh %132 : vector<8x32xf32>
    %134 = arith.mulf %130, %117 : vector<8x32xf32>
    %135 = arith.mulf %129, %133 : vector<8x32xf32>
    %136 = arith.addf %134, %135 : vector<8x32xf32>
    %137 = math.tanh %136 : vector<8x32xf32>
    %138 = arith.mulf %131, %137 : vector<8x32xf32>
    %c56 = arith.constant 56 : index
    %c0_43 = arith.constant 0 : index
    %139 = vector.load %arg6[%c56, %c0_43] : memref<64x128xf32, #tpu.memory_space<vmem>>, vector<8x128xf32>
    %c0_44 = arith.constant 0 : index
    %c0_45 = arith.constant 0 : index
    %140 = vector.load %arg2[%c0_44, %c0_45] : memref<32x128xf32, #tpu.memory_space<vmem>>, vector<32x128xf32>
    %cst_46 = arith.constant dense<0.000000e+00> : vector<8x128xf32>
    %141 = tpu.matmul %138, %140, %cst_46 {dimension_numbers = #tpu.dot_dimension_numbers<[1], [0], [0], [1], [0, 0, 1, 1], [], []>} : vector<8x32xf32>, vector<32x128xf32>, vector<8x128xf32> -> vector<8x128xf32>
    %142 = arith.addf %139, %141 : vector<8x128xf32>
    %143 = arith.negf %142 : vector<8x128xf32>
    %144 = math.exp %143 : vector<8x128xf32>
    %cst_47 = arith.constant 1.000000e+00 : f32
    %145 = vector.broadcast %cst_47 : f32 to vector<8x128xf32>
    %146 = arith.addf %145, %144 : vector<8x128xf32>
    %147 = arith.divf %145, %146 : vector<8x128xf32>
    %148 = vector.extract_strided_slice %147 {offsets = [0, 0], sizes = [8, 32], strides = [1, 1]} : vector<8x128xf32> to vector<8x32xf32>
    %149 = vector.extract_strided_slice %147 {offsets = [0, 32], sizes = [8, 32], strides = [1, 1]} : vector<8x128xf32> to vector<8x32xf32>
    %150 = vector.extract_strided_slice %147 {offsets = [0, 96], sizes = [8, 32], strides = [1, 1]} : vector<8x128xf32> to vector<8x32xf32>
    %151 = vector.extract_strided_slice %142 {offsets = [0, 64], sizes = [8, 32], strides = [1, 1]} : vector<8x128xf32> to vector<8x32xf32>
    %152 = math.tanh %151 : vector<8x32xf32>
    %153 = arith.mulf %149, %136 : vector<8x32xf32>
    %154 = arith.mulf %148, %152 : vector<8x32xf32>
    %155 = arith.addf %153, %154 : vector<8x32xf32>
    %156 = math.tanh %155 : vector<8x32xf32>
    %157 = arith.mulf %150, %156 : vector<8x32xf32>
    %c0_48 = arith.constant 0 : index
    %c0_49 = arith.constant 0 : index
    %158 = vector.load %arg3[%c0_48, %c0_49] : memref<32x128xf32, #tpu.memory_space<vmem>>, vector<32x128xf32>
    %cst_50 = arith.constant dense<0.000000e+00> : vector<8x128xf32>
    %159 = tpu.matmul %157, %158, %cst_50 {dimension_numbers = #tpu.dot_dimension_numbers<[1], [0], [0], [1], [0, 0, 1, 1], [], []>} : vector<8x32xf32>, vector<32x128xf32>, vector<8x128xf32> -> vector<8x128xf32>
    %c0_51 = arith.constant 0 : index
    %c0_52 = arith.constant 0 : index
    %160 = vector.load %arg4[%c0_51, %c0_52] : memref<1x128xf32, #tpu.memory_space<vmem>>, vector<1x128xf32>
    %161 = vector.broadcast %160 : vector<1x128xf32> to vector<8x128xf32>
    %162 = arith.addf %159, %161 : vector<8x128xf32>
    %c0_53 = arith.constant 0 : index
    %c0_54 = arith.constant 0 : index
    %163 = vector.load %arg5[%c0_53, %c0_54] : memref<8x128xf32, #tpu.memory_space<vmem>>, vector<8x128xf32>
    tpu.vector_store %arg5[%c0_53, %c0_54], %162 {strides = array<i32>} : memref<8x128xf32, #tpu.memory_space<vmem>>, vector<8x128xf32>,
    return
  }
}

</mosaic_0001>

<llo_original>
// kernel: forward.1
$region0: #{forward.1}
  #allocation0 [shape = 'u32[]', space=smem, size = 0x4, offset = 0x4, fixed_abs, tag = 'smem constant byte address 0x4 - core index']
  #allocation1 [shape = 'u32[144,128]{1,0:T(1,128)}', space=vmem, size = 0x12000, scoped, tag = 'internal scratch']
  #allocation2 [shape = 'f32[64,128]{1,0:T(8,128)}', space=vmem, size = 0x8000, scoped, tag = 'scratch operand']
  %s0 = inlined_call_operand.vmem [shape: f32[64,4], index: 0, kind: input, shape index: {}]
  %s1 = inlined_call_operand.vmem [shape: f32[4,128], index: 1, kind: input, shape index: {}]
  %s2 = inlined_call_operand.vmem [shape: f32[32,128], index: 2, kind: input, shape index: {}]
  %s3 = inlined_call_operand.vmem [shape: f32[32,128], index: 3, kind: input, shape index: {}]
  %s4 = inlined_call_operand.vmem [shape: f32[1,128], index: 4, kind: input, shape index: {}]
  %s5 = inlined_call_operand.vmem [shape: f32[8,128], index: 5, kind: output, shape index: {}]
  %s6 = sld [smem:[#allocation0]]
  $region30: #{forward.1} parent=0
    _
  %s8 = ssub.s32 1, %s6
  %s9 = scalar_select 0, %s8, %s6
  // Predicated region
  $region2: #{forward.1} parent=0 // pred_check
    _
  $region3: #{forward.1} parent=0 // pred_check_branch
    %11 = sbr.rel (0) target = $region5
  $region4: #{forward.1} parent=0 // pred_region
    _
  $region5: #{forward.1} parent=0 // pred_fallthru
    _
  // Predicated region
  $region6: #{forward.1} parent=0 // pred_check
    _
  $region7: #{forward.1} parent=0 // pred_check_branch
    %13 = sbr.rel (0) target = $region9
  $region8: #{forward.1} parent=0 // pred_region
    _
  $region9: #{forward.1} parent=0 // pred_fallthru
    _
  // Predicated region
  $region10: #{forward.1} parent=0 // pred_check
    _
  $region11: #{forward.1} parent=0 // pred_check_branch
    %15 = sbr.rel (0) target = $region13
  $region12: #{forward.1} parent=0 // pred_region
    _
  $region13: #{forward.1} parent=0 // pred_fallthru
    _
  // Predicated region
  $region14: #{forward.1} parent=0 // pred_check
    _
  $region15: #{forward.1} parent=0 // pred_check_branch
    %17 = sbr.rel (0) target = $region17
  $region16: #{forward.1} parent=0 // pred_region
    _
  $region17: #{forward.1} parent=0 // pred_fallthru
    _
  // Predicated region
  $region18: #{forward.1} parent=0 // pred_check
    _
  $region19: #{forward.1} parent=0 // pred_check_branch
    %19 = sbr.rel (0) target = $region21
  $region20: #{forward.1} parent=0 // pred_region
    _
  $region21: #{forward.1} parent=0 // pred_fallthru
    _
  %v20 = vld [vmem:[%s0] sm:$0xff]
  %v21 = vld [vmem:[%s0 + $0x8] sm:$0xff]
  %v22 = vld [vmem:[%s0 + $0x10] sm:$0xff]
  %v23 = vld [vmem:[%s0 + $0x18] sm:$0xff]
  %v24 = vld [vmem:[%s0 + $0x20] sm:$0xff]
  %v25 = vld [vmem:[%s0 + $0x28] sm:$0xff]
  %v26 = vld [vmem:[%s0 + $0x30] sm:$0xff]
  %v27 = vld [vmem:[%s0 + $0x38] sm:$0xff]
  %v28 = vld [vmem:[%s1] sm:$0xf]
  %vm29 = vcmask 31744
  %v31 = vsel %vm29, %v20, 0
  %v34 = vsel %vm29, %v21, 0
  %v37 = vsel %vm29, %v22, 0
  %v40 = vsel %vm29, %v23, 0
  %v43 = vsel %vm29, %v24, 0
  %v46 = vsel %vm29, %v25, 0
  %v49 = vsel %vm29, %v26, 0
  %v52 = vsel %vm29, %v27, 0
  %vm54 = vcmask 1043456
  %v56 = vsel %vm54, %v28, 0
  %58 = vmatprep.subr.mxu0 0.0
  %59 = vmatpush1.msra.mxu0 0.0
  %60 = vmatprep.subr.mxu0 0.0
  %61 = vmatpush1.msra.mxu0 0.0
  %62 = vmatprep.subr.mxu0 0.0
  %63 = vmatpush1.msra.mxu0 0.0
  %64 = vmatprep.subr.mxu0 0.0
  %65 = vmatpush1.msra.mxu0 0.0
  %66 = vmatprep.subr.mxu0 0.0
  %67 = vmatpush1.msra.mxu0 0.0
  %68 = vmatprep.subr.mxu0 0.0
  %69 = vmatpush1.msra.mxu0 0.0
  %70 = vmatprep.subr.mxu0 0.0
  %71 = vmatpush1.msra.mxu0 0.0
  %72 = vmatprep.subr.mxu0 0.0
  %73 = vmatpush1.msra.mxu0 0.0
  %74 = vmatprep.subr.mxu0 0.0
  %75 = vmatpush1.msra.mxu0 0.0
  %76 = vmatprep.subr.mxu0 0.0
  %77 = vmatpush1.msra.mxu0 0.0
  %78 = vmatprep.subr.mxu0 0.0
  %79 = vmatpush1.msra.mxu0 0.0
  %80 = vmatprep.subr.mxu0 0.0
  %81 = vmatpush1.msra.mxu0 0.0
  %82 = vmatprep.subr.mxu0 0.0
  %83 = vmatpush1.msra.mxu0 0.0
  %84 = vmatprep.subr.mxu0 0.0
  %85 = vmatpush1.msra.mxu0 0.0
  %86 = vmatprep.subr.mxu0 0.0
  %87 = vmatpush1.msra.mxu0 0.0
  %88 = vmatprep.subr.mxu0 0.0
  %89 = vmatpush1.msra.mxu0 %v56
  %90 = vmatprep.subr.mxu0 0.0
  %91 = vmatpush2.msra.mxu0 0.0
  %92 = vmatprep.subr.mxu0 0.0
  %93 = vmatpush2.msra.mxu0 0.0
  %94 = vmatprep.subr.mxu0 0.0
  %95 = vmatpush2.msra.mxu0 0.0
  %96 = vmatprep.subr.mxu0 0.0
  %97 = vmatpush2.msra.mxu0 0.0
  %98 = vmatprep.subr.mxu0 0.0
  %99 = vmatpush2.msra.mxu0 0.0
  %100 = vmatprep.subr.mxu0 0.0
  %101 = vmatpush2.msra.mxu0 0.0
  %102 = vmatprep.subr.mxu0 0.0
  %103 = vmatpush2.msra.mxu0 0.0
  %104 = vmatprep.subr.mxu0 0.0
  %105 = vmatpush2.msra.mxu0 0.0
  %106 = vmatprep.subr.mxu0 0.0
  %107 = vmatpush2.msra.mxu0 0.0
  %108 = vmatprep.subr.mxu0 0.0
  %109 = vmatpush2.msra.mxu0 0.0
  %110 = vmatprep.subr.mxu0 0.0
  %111 = vmatpush2.msra.mxu0 0.0
  %112 = vmatprep.subr.mxu0 0.0
  %113 = vmatpush2.msra.mxu0 0.0
  %114 = vmatprep.subr.mxu0 0.0
  %115 = vmatpush2.msra.mxu0 0.0
  %116 = vmatprep.subr.mxu0 0.0
  %117 = vmatpush2.msra.mxu0 0.0
  %118 = vmatprep.subr.mxu0 0.0
  %119 = vmatpush2.msra.mxu0 0.0
  %120 = vmatprep.subr.mxu0 0.0
  %121 = vmatpush2.msra.mxu0 0.0
  %122 = vmatprep.mubr.f32.mxu0 0.0
  %123 = vmatmul.mubr.f32.gmra.mxu0 %v31
  %v124 = vpop.f32.mrf.mxu0
  %v125 = vadd.f32 0.0, %v124
  %v126 = vpop.f32.mrf.mxu0
  %127 = vmatprep.mubr.f32.mxu0 0.0
  %128 = vmatmul.mubr.f32.gmra.mxu0 %v34
  %v129 = vpop.f32.mrf.mxu0
  %v130 = vadd.f32 0.0, %v129
  %v131 = vpop.f32.mrf.mxu0
  %132 = vmatprep.mubr.f32.mxu0 0.0
  %133 = vmatmul.mubr.f32.gmra.mxu0 %v37
  %v134 = vpop.f32.mrf.mxu0
  %v135 = vadd.f32 0.0, %v134
  %v136 = vpop.f32.mrf.mxu0
  %137 = vmatprep.mubr.f32.mxu0 0.0
  %138 = vmatmul.mubr.f32.gmra.mxu0 %v40
  %v139 = vpop.f32.mrf.mxu0
  %v140 = vadd.f32 0.0, %v139
  %v141 = vpop.f32.mrf.mxu0
  %142 = vmatprep.mubr.f32.mxu0 0.0
  %143 = vmatmul.mubr.f32.gmra.mxu0 %v43
  %v144 = vpop.f32.mrf.mxu0
  %v145 = vadd.f32 0.0, %v144
  %v146 = vpop.f32.mrf.mxu0
  %147 = vmatprep.mubr.f32.mxu0 0.0
  %148 = vmatmul.mubr.f32.gmra.mxu0 %v46
  %v149 = vpop.f32.mrf.mxu0
  %v150 = vadd.f32 0.0, %v149
  %v151 = vpop.f32.mrf.mxu0
  %152 = vmatprep.mubr.f32.mxu0 0.0
  %153 = vmatmul.mubr.f32.gmra.mxu0 %v49
  %v154 = vpop.f32.mrf.mxu0
  %v155 = vadd.f32 0.0, %v154
  %v156 = vpop.f32.mrf.mxu0
  %157 = vmatprep.mubr.f32.mxu0 0.0
  %158 = vmatmul.mubr.f32.gmra.mxu0 %v52
  %v159 = vpop.f32.mrf.mxu0
  %v160 = vadd.f32 0.0, %v159
  %v161 = vpop.f32.mrf.mxu0
  %162 = vdwg.mxu0
  %163 = vst [vmem:[#allocation2] sm:$0xff] %v125
  %164 = vst [vmem:[#allocation2 + $0x8] sm:$0xff] %v130
  %165 = vst [vmem:[#allocation2 + $0x10] sm:$0xff] %v135
  %166 = vst [vmem:[#allocation2 + $0x18] sm:$0xff] %v140
  %167 = vst [vmem:[#allocation2 + $0x20] sm:$0xff] %v145
  %168 = vst [vmem:[#allocation2 + $0x28] sm:$0xff] %v150
  %169 = vst [vmem:[#allocation2 + $0x30] sm:$0xff] %v155
  %170 = vst [vmem:[#allocation2 + $0x38] sm:$0xff] %v160
  %v171 = vld [vmem:[#allocation2] sm:$0xff]
  %v172 = vld [vmem:[%s2] sm:$0xff]
  %v173 = vld [vmem:[%s2 + $0x8] sm:$0xff]
  %v174 = vld [vmem:[%s2 + $0x10] sm:$0xff]
  %v175 = vld [vmem:[%s2 + $0x18] sm:$0xff]
  %vm176 = vcmask 261120
  %v178 = vsel %vm176, 0.0, 0
  %180 = vmatprep.subr.mxu0 0.0
  %181 = vmatpush1.msra.mxu0 0.0
  %182 = vmatprep.subr.mxu0 0.0
  %183 = vmatpush1.msra.mxu0 0.0
  %184 = vmatprep.subr.mxu0 0.0
  %185 = vmatpush1.msra.mxu0 0.0
  %186 = vmatprep.subr.mxu0 0.0
  %187 = vmatpush1.msra.mxu0 0.0
  %188 = vmatprep.subr.mxu0 0.0
  %189 = vmatpush1.msra.mxu0 0.0
  %190 = vmatprep.subr.mxu0 0.0
  %191 = vmatpush1.msra.mxu0 0.0
  %192 = vmatprep.subr.mxu0 0.0
  %193 = vmatpush1.msra.mxu0 0.0
  %194 = vmatprep.subr.mxu0 0.0
  %195 = vmatpush1.msra.mxu0 0.0
  %196 = vmatprep.subr.mxu0 0.0
  %197 = vmatpush1.msra.mxu0 0.0
  %198 = vmatprep.subr.mxu0 0.0
  %199 = vmatpush1.msra.mxu0 0.0
  %200 = vmatprep.subr.mxu0 0.0
  %201 = vmatpush1.msra.mxu0 0.0
  %202 = vmatprep.subr.mxu0 0.0
  %203 = vmatpush1.msra.mxu0 0.0
  %204 = vmatprep.subr.mxu0 0.0
  %205 = vmatpush1.msra.mxu0 %v175
  %206 = vmatprep.subr.mxu0 0.0
  %207 = vmatpush1.msra.mxu0 %v174
  %208 = vmatprep.subr.mxu0 0.0
  %209 = vmatpush1.msra.mxu0 %v173
  %210 = vmatprep.subr.mxu0 0.0
  %211 = vmatpush1.msra.mxu0 %v172
  %212 = vmatprep.subr.mxu0 0.0
  %213 = vmatpush2.msra.mxu0 0.0
  %214 = vmatprep.subr.mxu0 0.0
  %215 = vmatpush2.msra.mxu0 0.0
  %216 = vmatprep.subr.mxu0 0.0
  %217 = vmatpush2.msra.mxu0 0.0
  %218 = vmatprep.subr.mxu0 0.0
  %219 = vmatpush2.msra.mxu0 0.0
  %220 = vmatprep.subr.mxu0 0.0
  %221 = vmatpush2.msra.mxu0 0.0
  %222 = vmatprep.subr.mxu0 0.0
  %223 = vmatpush2.msra.mxu0 0.0
  %224 = vmatprep.subr.mxu0 0.0
  %225 = vmatpush2.msra.mxu0 0.0
  %226 = vmatprep.subr.mxu0 0.0
  %227 = vmatpush2.msra.mxu0 0.0
  %228 = vmatprep.subr.mxu0 0.0
  %229 = vmatpush2.msra.mxu0 0.0
  %230 = vmatprep.subr.mxu0 0.0
  %231 = vmatpush2.msra.mxu0 0.0
  %232 = vmatprep.subr.mxu0 0.0
  %233 = vmatpush2.msra.mxu0 0.0
  %234 = vmatprep.subr.mxu0 0.0
  %235 = vmatpush2.msra.mxu0 0.0
  %236 = vmatprep.subr.mxu0 0.0
  %237 = vmatpush2.msra.mxu0 0.0
  %238 = vmatprep.subr.mxu0 0.0
  %239 = vmatpush2.msra.mxu0 0.0
  %240 = vmatprep.subr.mxu0 0.0
  %241 = vmatpush2.msra.mxu0 0.0
  %242 = vmatprep.subr.mxu0 0.0
  %243 = vmatpush2.msra.mxu0 0.0
  %244 = vmatprep.mubr.f32.mxu0 0.0
  %245 = vmatmul.mubr.f32.gmra.mxu0 %v178
  %v246 = vpop.f32.mrf.mxu0
  %v247 = vadd.f32 0.0, %v246
  %v248 = vpop.f32.mrf.mxu0
  %249 = vdwg.mxu0
  %v250 = vadd.f32 %v171, %v247
  %v251 = vxor.u32 %v250, 2147483648
  %v252 = vmul.f32 %v251, 1.442695
  %v253 = vpow.pop %v252
  %v254 = vadd.f32 %v253, 1.0
  %v255 = vrcp.pop %v254
  %v256 = vmul.f32 1.0, %v255
  %v257 = vtanh.pop %v250
  %v258 = vmul.f32 %v256, 0.0
  %260 = vrot.lane.b32.xlu0 %v257, 64
  %v261 = vpop.permute.xlu0 %260
  %v263 = vmul.f32 %v256, %v261
  %265 = vrot.lane.b32.xlu0 %v263, 32
  %v266 = vpop.permute.xlu0 %265
  %v268 = vadd.f32 %v258, %v266
  %v269 = vtanh.pop %v268
  %271 = vrot.lane.b32.xlu0 %v269, 64
  %v272 = vpop.permute.xlu0 %271
  %v274 = vmul.f32 %v256, %v272
  %v275 = vld [vmem:[#allocation2 + $0x8] sm:$0xff]
  %277 = vrot.lane.b32.xlu0 %v274, 32
  %v278 = vpop.permute.xlu0 %277
  %v279 = vsel %vm176, %v278, 0
  %281 = vmatprep.subr.mxu0 0.0
  %282 = vmatpush1.msra.mxu0 0.0
  %283 = vmatprep.subr.mxu0 0.0
  %284 = vmatpush1.msra.mxu0 0.0
  %285 = vmatprep.subr.mxu0 0.0
  %286 = vmatpush1.msra.mxu0 0.0
  %287 = vmatprep.subr.mxu0 0.0
  %288 = vmatpush1.msra.mxu0 0.0
  %289 = vmatprep.subr.mxu0 0.0
  %290 = vmatpush1.msra.mxu0 0.0
  %291 = vmatprep.subr.mxu0 0.0
  %292 = vmatpush1.msra.mxu0 0.0
  %293 = vmatprep.subr.mxu0 0.0
  %294 = vmatpush1.msra.mxu0 0.0
  %295 = vmatprep.subr.mxu0 0.0
  %296 = vmatpush1.msra.mxu0 0.0
  %297 = vmatprep.subr.mxu0 0.0
  %298 = vmatpush1.msra.mxu0 0.0
  %299 = vmatprep.subr.mxu0 0.0
  %300 = vmatpush1.msra.mxu0 0.0
  %301 = vmatprep.subr.mxu0 0.0
  %302 = vmatpush1.msra.mxu0 0.0
  %303 = vmatprep.subr.mxu0 0.0
  %304 = vmatpush1.msra.mxu0 0.0
  %305 = vmatprep.subr.mxu0 0.0
  %306 = vmatpush1.msra.mxu0 %v175
  %307 = vmatprep.subr.mxu0 0.0
  %308 = vmatpush1.msra.mxu0 %v174
  %309 = vmatprep.subr.mxu0 0.0
  %310 = vmatpush1.msra.mxu0 %v173
  %311 = vmatprep.subr.mxu0 0.0
  %312 = vmatpush1.msra.mxu0 %v172
  %313 = vmatprep.subr.mxu0 0.0
  %314 = vmatpush2.msra.mxu0 0.0
  %315 = vmatprep.subr.mxu0 0.0
  %316 = vmatpush2.msra.mxu0 0.0
  %317 = vmatprep.subr.mxu0 0.0
  %318 = vmatpush2.msra.mxu0 0.0
  %319 = vmatprep.subr.mxu0 0.0
  %320 = vmatpush2.msra.mxu0 0.0
  %321 = vmatprep.subr.mxu0 0.0
  %322 = vmatpush2.msra.mxu0 0.0
  %323 = vmatprep.subr.mxu0 0.0
  %324 = vmatpush2.msra.mxu0 0.0
  %325 = vmatprep.subr.mxu0 0.0
  %326 = vmatpush2.msra.mxu0 0.0
  %327 = vmatprep.subr.mxu0 0.0
  %328 = vmatpush2.msra.mxu0 0.0
  %329 = vmatprep.subr.mxu0 0.0
  %330 = vmatpush2.msra.mxu0 0.0
  %331 = vmatprep.subr.mxu0 0.0
  %332 = vmatpush2.msra.mxu0 0.0
  %333 = vmatprep.subr.mxu0 0.0
  %334 = vmatpush2.msra.mxu0 0.0
  %335 = vmatprep.subr.mxu0 0.0
  %336 = vmatpush2.msra.mxu0 0.0
  %337 = vmatprep.subr.mxu0 0.0
  %338 = vmatpush2.msra.mxu0 0.0
  %339 = vmatprep.subr.mxu0 0.0
  %340 = vmatpush2.msra.mxu0 0.0
  %341 = vmatprep.subr.mxu0 0.0
  %342 = vmatpush2.msra.mxu0 0.0
  %343 = vmatprep.subr.mxu0 0.0
  %344 = vmatpush2.msra.mxu0 0.0
  %345 = vmatprep.mubr.f32.mxu0 0.0
  %346 = vmatmul.mubr.f32.gmra.mxu0 %v279
  %v347 = vpop.f32.mrf.mxu0
  %v348 = vadd.f32 0.0, %v347
  %v349 = vpop.f32.mrf.mxu0
  %350 = vdwg.mxu0
  %v351 = vadd.f32 %v275, %v348
  %v352 = vxor.u32 %v351, 2147483648
  %v353 = vmul.f32 %v352, 1.442695
  %v354 = vpow.pop %v353
  %v355 = vadd.f32 %v354, 1.0
  %v356 = vrcp.pop %v355
  %v357 = vmul.f32 1.0, %v356
  %v358 = vtanh.pop %v351
  %v359 = vmul.f32 %v357, %v268
  %361 = vrot.lane.b32.xlu0 %v358, 64
  %v362 = vpop.permute.xlu0 %361
  %v364 = vmul.f32 %v357, %v362
  %366 = vrot.lane.b32.xlu0 %v364, 32
  %v367 = vpop.permute.xlu0 %366
  %v369 = vadd.f32 %v359, %v367
  %v370 = vtanh.pop %v369
  %372 = vrot.lane.b32.xlu0 %v370, 64
  %v373 = vpop.permute.xlu0 %372
  %v375 = vmul.f32 %v357, %v373
  %v376 = vld [vmem:[#allocation2 + $0x10] sm:$0xff]
  %378 = vrot.lane.b32.xlu0 %v375, 32
  %v379 = vpop.permute.xlu0 %378
  %v380 = vsel %vm176, %v379, 0
  %382 = vmatprep.subr.mxu0 0.0
  %383 = vmatpush1.msra.mxu0 0.0
  %384 = vmatprep.subr.mxu0 0.0
  %385 = vmatpush1.msra.mxu0 0.0
  %386 = vmatprep.subr.mxu0 0.0
  %387 = vmatpush1.msra.mxu0 0.0
  %388 = vmatprep.subr.mxu0 0.0
  %389 = vmatpush1.msra.mxu0 0.0
  %390 = vmatprep.subr.mxu0 0.0
  %391 = vmatpush1.msra.mxu0 0.0
  %392 = vmatprep.subr.mxu0 0.0
  %393 = vmatpush1.msra.mxu0 0.0
  %394 = vmatprep.subr.mxu0 0.0
  %395 = vmatpush1.msra.mxu0 0.0
  %396 = vmatprep.subr.mxu0 0.0
  %397 = vmatpush1.msra.mxu0 0.0
  %398 = vmatprep.subr.mxu0 0.0
  %399 = vmatpush1.msra.mxu0 0.0
  %400 = vmatprep.subr.mxu0 0.0
  %401 = vmatpush1.msra.mxu0 0.0
  %402 = vmatprep.subr.mxu0 0.0
  %403 = vmatpush1.msra.mxu0 0.0
  %404 = vmatprep.subr.mxu0 0.0
  %405 = vmatpush1.msra.mxu0 0.0
  %406 = vmatprep.subr.mxu0 0.0
  %407 = vmatpush1.msra.mxu0 %v175
  %408 = vmatprep.subr.mxu0 0.0
  %409 = vmatpush1.msra.mxu0 %v174
  %410 = vmatprep.subr.mxu0 0.0
  %411 = vmatpush1.msra.mxu0 %v173
  %412 = vmatprep.subr.mxu0 0.0
  %413 = vmatpush1.msra.mxu0 %v172
  %414 = vmatprep.subr.mxu0 0.0
  %415 = vmatpush2.msra.mxu0 0.0
  %416 = vmatprep.subr.mxu0 0.0
  %417 = vmatpush2.msra.mxu0 0.0
  %418 = vmatprep.subr.mxu0 0.0
  %419 = vmatpush2.msra.mxu0 0.0
  %420 = vmatprep.subr.mxu0 0.0
  %421 = vmatpush2.msra.mxu0 0.0
  %422 = vmatprep.subr.mxu0 0.0
  %423 = vmatpush2.msra.mxu0 0.0
  %424 = vmatprep.subr.mxu0 0.0
  %425 = vmatpush2.msra.mxu0 0.0
  %426 = vmatprep.subr.mxu0 0.0
  %427 = vmatpush2.msra.mxu0 0.0
  %428 = vmatprep.subr.mxu0 0.0
  %429 = vmatpush2.msra.mxu0 0.0
  %430 = vmatprep.subr.mxu0 0.0
  %431 = vmatpush2.msra.mxu0 0.0
  %432 = vmatprep.subr.mxu0 0.0
  %433 = vmatpush2.msra.mxu0 0.0
  %434 = vmatprep.subr.mxu0 0.0
  %435 = vmatpush2.msra.mxu0 0.0
  %436 = vmatprep.subr.mxu0 0.0
  %437 = vmatpush2.msra.mxu0 0.0
  %438 = vmatprep.subr.mxu0 0.0
  %439 = vmatpush2.msra.mxu0 0.0
  %440 = vmatprep.subr.mxu0 0.0
  %441 = vmatpush2.msra.mxu0 0.0
  %442 = vmatprep.subr.mxu0 0.0
  %443 = vmatpush2.msra.mxu0 0.0
  %444 = vmatprep.subr.mxu0 0.0
  %445 = vmatpush2.msra.mxu0 0.0
  %446 = vmatprep.mubr.f32.mxu0 0.0
  %447 = vmatmul.mubr.f32.gmra.mxu0 %v380
  %v448 = vpop.f32.mrf.mxu0
  %v449 = vadd.f32 0.0, %v448
  %v450 = vpop.f32.mrf.mxu0
  %451 = vdwg.mxu0
  %v452 = vadd.f32 %v376, %v449
  %v453 = vxor.u32 %v452, 2147483648
  %v454 = vmul.f32 %v453, 1.442695
  %v455 = vpow.pop %v454
  %v456 = vadd.f32 %v455, 1.0
  %v457 = vrcp.pop %v456
  %v458 = vmul.f32 1.0, %v457
  %v459 = vtanh.pop %v452
  %v460 = vmul.f32 %v458, %v369
  %462 = vrot.lane.b32.xlu0 %v459, 64
  %v463 = vpop.permute.xlu0 %462
  %v465 = vmul.f32 %v458, %v463
  %467 = vrot.lane.b32.xlu0 %v465, 32
  %v468 = vpop.permute.xlu0 %467
  %v470 = vadd.f32 %v460, %v468
  %v471 = vtanh.pop %v470
  %473 = vrot.lane.b32.xlu0 %v471, 64
  %v474 = vpop.permute.xlu0 %473
  %v476 = vmul.f32 %v458, %v474
  %v477 = vld [vmem:[#allocation2 + $0x18] sm:$0xff]
  %479 = vrot.lane.b32.xlu0 %v476, 32
  %v480 = vpop.permute.xlu0 %479
  %v481 = vsel %vm176, %v480, 0
  %483 = vmatprep.subr.mxu0 0.0
  %484 = vmatpush1.msra.mxu0 0.0
  %485 = vmatprep.subr.mxu0 0.0
  %486 = vmatpush1.msra.mxu0 0.0
  %487 = vmatprep.subr.mxu0 0.0
  %488 = vmatpush1.msra.mxu0 0.0
  %489 = vmatprep.subr.mxu0 0.0
  %490 = vmatpush1.msra.mxu0 0.0
  %491 = vmatprep.subr.mxu0 0.0
  %492 = vmatpush1.msra.mxu0 0.0
  %493 = vmatprep.subr.mxu0 0.0
  %494 = vmatpush1.msra.mxu0 0.0
  %495 = vmatprep.subr.mxu0 0.0
  %496 = vmatpush1.msra.mxu0 0.0
  %497 = vmatprep.subr.mxu0 0.0
  %498 = vmatpush1.msra.mxu0 0.0
  %499 = vmatprep.subr.mxu0 0.0
  %500 = vmatpush1.msra.mxu0 0.0
  %501 = vmatprep.subr.mxu0 0.0
  %502 = vmatpush1.msra.mxu0 0.0
  %503 = vmatprep.subr.mxu0 0.0
  %504 = vmatpush1.msra.mxu0 0.0
  %505 = vmatprep.subr.mxu0 0.0
  %506 = vmatpush1.msra.mxu0 0.0
  %507 = vmatprep.subr.mxu0 0.0
  %508 = vmatpush1.msra.mxu0 %v175
  %509 = vmatprep.subr.mxu0 0.0
  %510 = vmatpush1.msra.mxu0 %v174
  %511 = vmatprep.subr.mxu0 0.0
  %512 = vmatpush1.msra.mxu0 %v173
  %513 = vmatprep.subr.mxu0 0.0
  %514 = vmatpush1.msra.mxu0 %v172
  %515 = vmatprep.subr.mxu0 0.0
  %516 = vmatpush2.msra.mxu0 0.0
  %517 = vmatprep.subr.mxu0 0.0
  %518 = vmatpush2.msra.mxu0 0.0
  %519 = vmatprep.subr.mxu0 0.0
  %520 = vmatpush2.msra.mxu0 0.0
  %521 = vmatprep.subr.mxu0 0.0
  %522 = vmatpush2.msra.mxu0 0.0
  %523 = vmatprep.subr.mxu0 0.0
  %524 = vmatpush2.msra.mxu0 0.0
  %525 = vmatprep.subr.mxu0 0.0
  %526 = vmatpush2.msra.mxu0 0.0
  %527 = vmatprep.subr.mxu0 0.0
  %528 = vmatpush2.msra.mxu0 0.0
  %529 = vmatprep.subr.mxu0 0.0
  %530 = vmatpush2.msra.mxu0 0.0
  %531 = vmatprep.subr.mxu0 0.0
  %532 = vmatpush2.msra.mxu0 0.0
  %533 = vmatprep.subr.mxu0 0.0
  %534 = vmatpush2.msra.mxu0 0.0
  %535 = vmatprep.subr.mxu0 0.0
  %536 = vmatpush2.msra.mxu0 0.0
  %537 = vmatprep.subr.mxu0 0.0
  %538 = vmatpush2.msra.mxu0 0.0
  %539 = vmatprep.subr.mxu0 0.0
  %540 = vmatpush2.msra.mxu0 0.0
  %541 = vmatprep.subr.mxu0 0.0
  %542 = vmatpush2.msra.mxu0 0.0
  %543 = vmatprep.subr.mxu0 0.0
  %544 = vmatpush2.msra.mxu0 0.0
  %545 = vmatprep.subr.mxu0 0.0
  %546 = vmatpush2.msra.mxu0 0.0
  %547 = vmatprep.mubr.f32.mxu0 0.0
  %548 = vmatmul.mubr.f32.gmra.mxu0 %v481
  %v549 = vpop.f32.mrf.mxu0
  %v550 = vadd.f32 0.0, %v549
  %v551 = vpop.f32.mrf.mxu0
  %552 = vdwg.mxu0
  %v553 = vadd.f32 %v477, %v550
  %v554 = vxor.u32 %v553, 2147483648
  %v555 = vmul.f32 %v554, 1.442695
  %v556 = vpow.pop %v555
  %v557 = vadd.f32 %v556, 1.0
  %v558 = vrcp.pop %v557
  %v559 = vmul.f32 1.0, %v558
  %v560 = vtanh.pop %v553
  %v561 = vmul.f32 %v559, %v470
  %563 = vrot.lane.b32.xlu0 %v560, 64
  %v564 = vpop.permute.xlu0 %563
  %v566 = vmul.f32 %v559, %v564
  %568 = vrot.lane.b32.xlu0 %v566, 32
  %v569 = vpop.permute.xlu0 %568
  %v571 = vadd.f32 %v561, %v569
  %v572 = vtanh.pop %v571
  %574 = vrot.lane.b32.xlu0 %v572, 64
  %v575 = vpop.permute.xlu0 %574
  %v577 = vmul.f32 %v559, %v575
  %v578 = vld [vmem:[#allocation2 + $0x20] sm:$0xff]
  %580 = vrot.lane.b32.xlu0 %v577, 32
  %v581 = vpop.permute.xlu0 %580
  %v582 = vsel %vm176, %v581, 0
  %584 = vmatprep.subr.mxu0 0.0
  %585 = vmatpush1.msra.mxu0 0.0
  %586 = vmatprep.subr.mxu0 0.0
  %587 = vmatpush1.msra.mxu0 0.0
  %588 = vmatprep.subr.mxu0 0.0
  %589 = vmatpush1.msra.mxu0 0.0
  %590 = vmatprep.subr.mxu0 0.0
  %591 = vmatpush1.msra.mxu0 0.0
  %592 = vmatprep.subr.mxu0 0.0
  %593 = vmatpush1.msra.mxu0 0.0
  %594 = vmatprep.subr.mxu0 0.0
  %595 = vmatpush1.msra.mxu0 0.0
  %596 = vmatprep.subr.mxu0 0.0
  %597 = vmatpush1.msra.mxu0 0.0
  %598 = vmatprep.subr.mxu0 0.0
  %599 = vmatpush1.msra.mxu0 0.0
  %600 = vmatprep.subr.mxu0 0.0
  %601 = vmatpush1.msra.mxu0 0.0
  %602 = vmatprep.subr.mxu0 0.0
  %603 = vmatpush1.msra.mxu0 0.0
  %604 = vmatprep.subr.mxu0 0.0
  %605 = vmatpush1.msra.mxu0 0.0
  %606 = vmatprep.subr.mxu0 0.0
  %607 = vmatpush1.msra.mxu0 0.0
  %608 = vmatprep.subr.mxu0 0.0
  %609 = vmatpush1.msra.mxu0 %v175
  %610 = vmatprep.subr.mxu0 0.0
  %611 = vmatpush1.msra.mxu0 %v174
  %612 = vmatprep.subr.mxu0 0.0
  %613 = vmatpush1.msra.mxu0 %v173
  %614 = vmatprep.subr.mxu0 0.0
  %615 = vmatpush1.msra.mxu0 %v172
  %616 = vmatprep.subr.mxu0 0.0
  %617 = vmatpush2.msra.mxu0 0.0
  %618 = vmatprep.subr.mxu0 0.0
  %619 = vmatpush2.msra.mxu0 0.0
  %620 = vmatprep.subr.mxu0 0.0
  %621 = vmatpush2.msra.mxu0 0.0
  %622 = vmatprep.subr.mxu0 0.0
  %623 = vmatpush2.msra.mxu0 0.0
  %624 = vmatprep.subr.mxu0 0.0
  %625 = vmatpush2.msra.mxu0 0.0
  %626 = vmatprep.subr.mxu0 0.0
  %627 = vmatpush2.msra.mxu0 0.0
  %628 = vmatprep.subr.mxu0 0.0
  %629 = vmatpush2.msra.mxu0 0.0
  %630 = vmatprep.subr.mxu0 0.0
  %631 = vmatpush2.msra.mxu0 0.0
  %632 = vmatprep.subr.mxu0 0.0
  %633 = vmatpush2.msra.mxu0 0.0
  %634 = vmatprep.subr.mxu0 0.0
  %635 = vmatpush2.msra.mxu0 0.0
  %636 = vmatprep.subr.mxu0 0.0
  %637 = vmatpush2.msra.mxu0 0.0
  %638 = vmatprep.subr.mxu0 0.0
  %639 = vmatpush2.msra.mxu0 0.0
  %640 = vmatprep.subr.mxu0 0.0
  %641 = vmatpush2.msra.mxu0 0.0
  %642 = vmatprep.subr.mxu0 0.0
  %643 = vmatpush2.msra.mxu0 0.0
  %644 = vmatprep.subr.mxu0 0.0
  %645 = vmatpush2.msra.mxu0 0.0
  %646 = vmatprep.subr.mxu0 0.0
  %647 = vmatpush2.msra.mxu0 0.0
  %648 = vmatprep.mubr.f32.mxu0 0.0
  %649 = vmatmul.mubr.f32.gmra.mxu0 %v582
  %v650 = vpop.f32.mrf.mxu0
  %v651 = vadd.f32 0.0, %v650
  %v652 = vpop.f32.mrf.mxu0
  %653 = vdwg.mxu0
  %v654 = vadd.f32 %v578, %v651
  %v655 = vxor.u32 %v654, 2147483648
  %v656 = vmul.f32 %v655, 1.442695
  %v657 = vpow.pop %v656
  %v658 = vadd.f32 %v657, 1.0
  %v659 = vrcp.pop %v658
  %v660 = vmul.f32 1.0, %v659
  %v661 = vtanh.pop %v654
  %v662 = vmul.f32 %v660, %v571
  %664 = vrot.lane.b32.xlu0 %v661, 64
  %v665 = vpop.permute.xlu0 %664
  %v667 = vmul.f32 %v660, %v665
  %669 = vrot.lane.b32.xlu0 %v667, 32
  %v670 = vpop.permute.xlu0 %669
  %v672 = vadd.f32 %v662, %v670
  %v673 = vtanh.pop %v672
  %675 = vrot.lane.b32.xlu0 %v673, 64
  %v676 = vpop.permute.xlu0 %675
  %v678 = vmul.f32 %v660, %v676
  %v679 = vld [vmem:[#allocation2 + $0x28] sm:$0xff]
  %681 = vrot.lane.b32.xlu0 %v678, 32
  %v682 = vpop.permute.xlu0 %681
  %v683 = vsel %vm176, %v682, 0
  %685 = vmatprep.subr.mxu0 0.0
  %686 = vmatpush1.msra.mxu0 0.0
  %687 = vmatprep.subr.mxu0 0.0
  %688 = vmatpush1.msra.mxu0 0.0
  %689 = vmatprep.subr.mxu0 0.0
  %690 = vmatpush1.msra.mxu0 0.0
  %691 = vmatprep.subr.mxu0 0.0
  %692 = vmatpush1.msra.mxu0 0.0
  %693 = vmatprep.subr.mxu0 0.0
  %694 = vmatpush1.msra.mxu0 0.0
  %695 = vmatprep.subr.mxu0 0.0
  %696 = vmatpush1.msra.mxu0 0.0
  %697 = vmatprep.subr.mxu0 0.0
  %698 = vmatpush1.msra.mxu0 0.0
  %699 = vmatprep.subr.mxu0 0.0
  %700 = vmatpush1.msra.mxu0 0.0
  %701 = vmatprep.subr.mxu0 0.0
  %702 = vmatpush1.msra.mxu0 0.0
  %703 = vmatprep.subr.mxu0 0.0
  %704 = vmatpush1.msra.mxu0 0.0
  %705 = vmatprep.subr.mxu0 0.0
  %706 = vmatpush1.msra.mxu0 0.0
  %707 = vmatprep.subr.mxu0 0.0
  %708 = vmatpush1.msra.mxu0 0.0
  %709 = vmatprep.subr.mxu0 0.0
  %710 = vmatpush1.msra.mxu0 %v175
  %711 = vmatprep.subr.mxu0 0.0
  %712 = vmatpush1.msra.mxu0 %v174
  %713 = vmatprep.subr.mxu0 0.0
  %714 = vmatpush1.msra.mxu0 %v173
  %715 = vmatprep.subr.mxu0 0.0
  %716 = vmatpush1.msra.mxu0 %v172
  %717 = vmatprep.subr.mxu0 0.0
  %718 = vmatpush2.msra.mxu0 0.0
  %719 = vmatprep.subr.mxu0 0.0
  %720 = vmatpush2.msra.mxu0 0.0
  %721 = vmatprep.subr.mxu0 0.0
  %722 = vmatpush2.msra.mxu0 0.0
  %723 = vmatprep.subr.mxu0 0.0
  %724 = vmatpush2.msra.mxu0 0.0
  %725 = vmatprep.subr.mxu0 0.0
  %726 = vmatpush2.msra.mxu0 0.0
  %727 = vmatprep.subr.mxu0 0.0
  %728 = vmatpush2.msra.mxu0 0.0
  %729 = vmatprep.subr.mxu0 0.0
  %730 = vmatpush2.msra.mxu0 0.0
  %731 = vmatprep.subr.mxu0 0.0
  %732 = vmatpush2.msra.mxu0 0.0
  %733 = vmatprep.subr.mxu0 0.0
  %734 = vmatpush2.msra.mxu0 0.0
  %735 = vmatprep.subr.mxu0 0.0
  %736 = vmatpush2.msra.mxu0 0.0
  %737 = vmatprep.subr.mxu0 0.0
  %738 = vmatpush2.msra.mxu0 0.0
  %739 = vmatprep.subr.mxu0 0.0
  %740 = vmatpush2.msra.mxu0 0.0
  %741 = vmatprep.subr.mxu0 0.0
  %742 = vmatpush2.msra.mxu0 0.0
  %743 = vmatprep.subr.mxu0 0.0
  %744 = vmatpush2.msra.mxu0 0.0
  %745 = vmatprep.subr.mxu0 0.0
  %746 = vmatpush2.msra.mxu0 0.0
  %747 = vmatprep.subr.mxu0 0.0
  %748 = vmatpush2.msra.mxu0 0.0
  %749 = vmatprep.mubr.f32.mxu0 0.0
  %750 = vmatmul.mubr.f32.gmra.mxu0 %v683
  %v751 = vpop.f32.mrf.mxu0
  %v752 = vadd.f32 0.0, %v751
  %v753 = vpop.f32.mrf.mxu0
  %754 = vdwg.mxu0
  %v755 = vadd.f32 %v679, %v752
  %v756 = vxor.u32 %v755, 2147483648
  %v757 = vmul.f32 %v756, 1.442695
  %v758 = vpow.pop %v757
  %v759 = vadd.f32 %v758, 1.0
  %v760 = vrcp.pop %v759
  %v761 = vmul.f32 1.0, %v760
  %v762 = vtanh.pop %v755
  %v763 = vmul.f32 %v761, %v672
  %765 = vrot.lane.b32.xlu0 %v762, 64
  %v766 = vpop.permute.xlu0 %765
  %v768 = vmul.f32 %v761, %v766
  %770 = vrot.lane.b32.xlu0 %v768, 32
  %v771 = vpop.permute.xlu0 %770
  %v773 = vadd.f32 %v763, %v771
  %v774 = vtanh.pop %v773
  %776 = vrot.lane.b32.xlu0 %v774, 64
  %v777 = vpop.permute.xlu0 %776
  %v779 = vmul.f32 %v761, %v777
  %v780 = vld [vmem:[#allocation2 + $0x30] sm:$0xff]
  %782 = vrot.lane.b32.xlu0 %v779, 32
  %v783 = vpop.permute.xlu0 %782
  %v784 = vsel %vm176, %v783, 0
  %786 = vmatprep.subr.mxu0 0.0
  %787 = vmatpush1.msra.mxu0 0.0
  %788 = vmatprep.subr.mxu0 0.0
  %789 = vmatpush1.msra.mxu0 0.0
  %790 = vmatprep.subr.mxu0 0.0
  %791 = vmatpush1.msra.mxu0 0.0
  %792 = vmatprep.subr.mxu0 0.0
  %793 = vmatpush1.msra.mxu0 0.0
  %794 = vmatprep.subr.mxu0 0.0
  %795 = vmatpush1.msra.mxu0 0.0
  %796 = vmatprep.subr.mxu0 0.0
  %797 = vmatpush1.msra.mxu0 0.0
  %798 = vmatprep.subr.mxu0 0.0
  %799 = vmatpush1.msra.mxu0 0.0
  %800 = vmatprep.subr.mxu0 0.0
  %801 = vmatpush1.msra.mxu0 0.0
  %802 = vmatprep.subr.mxu0 0.0
  %803 = vmatpush1.msra.mxu0 0.0
  %804 = vmatprep.subr.mxu0 0.0
  %805 = vmatpush1.msra.mxu0 0.0
  %806 = vmatprep.subr.mxu0 0.0
  %807 = vmatpush1.msra.mxu0 0.0
  %808 = vmatprep.subr.mxu0 0.0
  %809 = vmatpush1.msra.mxu0 0.0
  %810 = vmatprep.subr.mxu0 0.0
  %811 = vmatpush1.msra.mxu0 %v175
  %812 = vmatprep.subr.mxu0 0.0
  %813 = vmatpush1.msra.mxu0 %v174
  %814 = vmatprep.subr.mxu0 0.0
  %815 = vmatpush1.msra.mxu0 %v173
  %816 = vmatprep.subr.mxu0 0.0
  %817 = vmatpush1.msra.mxu0 %v172
  %818 = vmatprep.subr.mxu0 0.0
  %819 = vmatpush2.msra.mxu0 0.0
  %820 = vmatprep.subr.mxu0 0.0
  %821 = vmatpush2.msra.mxu0 0.0
  %822 = vmatprep.subr.mxu0 0.0
  %823 = vmatpush2.msra.mxu0 0.0
  %824 = vmatprep.subr.mxu0 0.0
  %825 = vmatpush2.msra.mxu0 0.0
  %826 = vmatprep.subr.mxu0 0.0
  %827 = vmatpush2.msra.mxu0 0.0
  %828 = vmatprep.subr.mxu0 0.0
  %829 = vmatpush2.msra.mxu0 0.0
  %830 = vmatprep.subr.mxu0 0.0
  %831 = vmatpush2.msra.mxu0 0.0
  %832 = vmatprep.subr.mxu0 0.0
  %833 = vmatpush2.msra.mxu0 0.0
  %834 = vmatprep.subr.mxu0 0.0
  %835 = vmatpush2.msra.mxu0 0.0
  %836 = vmatprep.subr.mxu0 0.0
  %837 = vmatpush2.msra.mxu0 0.0
  %838 = vmatprep.subr.mxu0 0.0
  %839 = vmatpush2.msra.mxu0 0.0
  %840 = vmatprep.subr.mxu0 0.0
  %841 = vmatpush2.msra.mxu0 0.0
  %842 = vmatprep.subr.mxu0 0.0
  %843 = vmatpush2.msra.mxu0 0.0
  %844 = vmatprep.subr.mxu0 0.0
  %845 = vmatpush2.msra.mxu0 0.0
  %846 = vmatprep.subr.mxu0 0.0
  %847 = vmatpush2.msra.mxu0 0.0
  %848 = vmatprep.subr.mxu0 0.0
  %849 = vmatpush2.msra.mxu0 0.0
  %850 = vmatprep.mubr.f32.mxu0 0.0
  %851 = vmatmul.mubr.f32.gmra.mxu0 %v784
  %v852 = vpop.f32.mrf.mxu0
  %v853 = vadd.f32 0.0, %v852
  %v854 = vpop.f32.mrf.mxu0
  %855 = vdwg.mxu0
  %v856 = vadd.f32 %v780, %v853
  %v857 = vxor.u32 %v856, 2147483648
  %v858 = vmul.f32 %v857, 1.442695
  %v859 = vpow.pop %v858
  %v860 = vadd.f32 %v859, 1.0
  %v861 = vrcp.pop %v860
  %v862 = vmul.f32 1.0, %v861
  %v863 = vtanh.pop %v856
  %v864 = vmul.f32 %v862, %v773
  %866 = vrot.lane.b32.xlu0 %v863, 64
  %v867 = vpop.permute.xlu0 %866
  %v869 = vmul.f32 %v862, %v867
  %871 = vrot.lane.b32.xlu0 %v869, 32
  %v872 = vpop.permute.xlu0 %871
  %v874 = vadd.f32 %v864, %v872
  %v875 = vtanh.pop %v874
  %877 = vrot.lane.b32.xlu0 %v875, 64
  %v878 = vpop.permute.xlu0 %877
  %v880 = vmul.f32 %v862, %v878
  %v881 = vld [vmem:[#allocation2 + $0x38] sm:$0xff]
  %883 = vrot.lane.b32.xlu0 %v880, 32
  %v884 = vpop.permute.xlu0 %883
  %v885 = vsel %vm176, %v884, 0
  %887 = vmatprep.subr.mxu0 0.0
  %888 = vmatpush1.msra.mxu0 0.0
  %889 = vmatprep.subr.mxu0 0.0
  %890 = vmatpush1.msra.mxu0 0.0
  %891 = vmatprep.subr.mxu0 0.0
  %892 = vmatpush1.msra.mxu0 0.0
  %893 = vmatprep.subr.mxu0 0.0
  %894 = vmatpush1.msra.mxu0 0.0
  %895 = vmatprep.subr.mxu0 0.0
  %896 = vmatpush1.msra.mxu0 0.0
  %897 = vmatprep.subr.mxu0 0.0
  %898 = vmatpush1.msra.mxu0 0.0
  %899 = vmatprep.subr.mxu0 0.0
  %900 = vmatpush1.msra.mxu0 0.0
  %901 = vmatprep.subr.mxu0 0.0
  %902 = vmatpush1.msra.mxu0 0.0
  %903 = vmatprep.subr.mxu0 0.0
  %904 = vmatpush1.msra.mxu0 0.0
  %905 = vmatprep.subr.mxu0 0.0
  %906 = vmatpush1.msra.mxu0 0.0
  %907 = vmatprep.subr.mxu0 0.0
  %908 = vmatpush1.msra.mxu0 0.0
  %909 = vmatprep.subr.mxu0 0.0
  %910 = vmatpush1.msra.mxu0 0.0
  %911 = vmatprep.subr.mxu0 0.0
  %912 = vmatpush1.msra.mxu0 %v175
  %913 = vmatprep.subr.mxu0 0.0
  %914 = vmatpush1.msra.mxu0 %v174
  %915 = vmatprep.subr.mxu0 0.0
  %916 = vmatpush1.msra.mxu0 %v173
  %917 = vmatprep.subr.mxu0 0.0
  %918 = vmatpush1.msra.mxu0 %v172
  %919 = vmatprep.subr.mxu0 0.0
  %920 = vmatpush2.msra.mxu0 0.0
  %921 = vmatprep.subr.mxu0 0.0
  %922 = vmatpush2.msra.mxu0 0.0
  %923 = vmatprep.subr.mxu0 0.0
  %924 = vmatpush2.msra.mxu0 0.0
  %925 = vmatprep.subr.mxu0 0.0
  %926 = vmatpush2.msra.mxu0 0.0
  %927 = vmatprep.subr.mxu0 0.0
  %928 = vmatpush2.msra.mxu0 0.0
  %929 = vmatprep.subr.mxu0 0.0
  %930 = vmatpush2.msra.mxu0 0.0
  %931 = vmatprep.subr.mxu0 0.0
  %932 = vmatpush2.msra.mxu0 0.0
  %933 = vmatprep.subr.mxu0 0.0
  %934 = vmatpush2.msra.mxu0 0.0
  %935 = vmatprep.subr.mxu0 0.0
  %936 = vmatpush2.msra.mxu0 0.0
  %937 = vmatprep.subr.mxu0 0.0
  %938 = vmatpush2.msra.mxu0 0.0
  %939 = vmatprep.subr.mxu0 0.0
  %940 = vmatpush2.msra.mxu0 0.0
  %941 = vmatprep.subr.mxu0 0.0
  %942 = vmatpush2.msra.mxu0 0.0
  %943 = vmatprep.subr.mxu0 0.0
  %944 = vmatpush2.msra.mxu0 0.0
  %945 = vmatprep.subr.mxu0 0.0
  %946 = vmatpush2.msra.mxu0 0.0
  %947 = vmatprep.subr.mxu0 0.0
  %948 = vmatpush2.msra.mxu0 0.0
  %949 = vmatprep.subr.mxu0 0.0
  %950 = vmatpush2.msra.mxu0 0.0
  %951 = vmatprep.mubr.f32.mxu0 0.0
  %952 = vmatmul.mubr.f32.gmra.mxu0 %v885
  %v953 = vpop.f32.mrf.mxu0
  %v954 = vadd.f32 0.0, %v953
  %v955 = vpop.f32.mrf.mxu0
  %956 = vdwg.mxu0
  %v957 = vadd.f32 %v881, %v954
  %v958 = vxor.u32 %v957, 2147483648
  %v959 = vmul.f32 %v958, 1.442695
  %v960 = vpow.pop %v959
  %v961 = vadd.f32 %v960, 1.0
  %v962 = vrcp.pop %v961
  %v963 = vmul.f32 1.0, %v962
  %v964 = vtanh.pop %v957
  %v965 = vmul.f32 %v963, %v874
  %967 = vrot.lane.b32.xlu0 %v964, 64
  %v968 = vpop.permute.xlu0 %967
  %v970 = vmul.f32 %v963, %v968
  %972 = vrot.lane.b32.xlu0 %v970, 32
  %v973 = vpop.permute.xlu0 %972
  %v975 = vadd.f32 %v965, %v973
  %v976 = vtanh.pop %v975
  %978 = vrot.lane.b32.xlu0 %v976, 64
  %v979 = vpop.permute.xlu0 %978
  %v981 = vmul.f32 %v963, %v979
  %v982 = vld [vmem:[%s3] sm:$0xff]
  %v983 = vld [vmem:[%s3 + $0x8] sm:$0xff]
  %v984 = vld [vmem:[%s3 + $0x10] sm:$0xff]
  %v985 = vld [vmem:[%s3 + $0x18] sm:$0xff]
  %v986 = vld [vmem:[%s4] sm:$0x1]
  %v988 = vlaneseq
  %v989 = vshrl.u32 %v988, 7
  %v990 = vsub.s32 0, %v989
  %v991 = vrot.slane %v986, %v990
  %994 = vrot.lane.b32.xlu0 %v981, 32
  %v995 = vpop.permute.xlu0 %994
  %v996 = vsel %vm176, %v995, 0
  %998 = vmatprep.subr.mxu0 0.0
  %999 = vmatpush1.msra.mxu0 0.0
  %1000 = vmatprep.subr.mxu0 0.0
  %1001 = vmatpush1.msra.mxu0 0.0
  %1002 = vmatprep.subr.mxu0 0.0
  %1003 = vmatpush1.msra.mxu0 0.0
  %1004 = vmatprep.subr.mxu0 0.0
  %1005 = vmatpush1.msra.mxu0 0.0
  %1006 = vmatprep.subr.mxu0 0.0
  %1007 = vmatpush1.msra.mxu0 0.0
  %1008 = vmatprep.subr.mxu0 0.0
  %1009 = vmatpush1.msra.mxu0 0.0
  %1010 = vmatprep.subr.mxu0 0.0
  %1011 = vmatpush1.msra.mxu0 0.0
  %1012 = vmatprep.subr.mxu0 0.0
  %1013 = vmatpush1.msra.mxu0 0.0
  %1014 = vmatprep.subr.mxu0 0.0
  %1015 = vmatpush1.msra.mxu0 0.0
  %1016 = vmatprep.subr.mxu0 0.0
  %1017 = vmatpush1.msra.mxu0 0.0
  %1018 = vmatprep.subr.mxu0 0.0
  %1019 = vmatpush1.msra.mxu0 0.0
  %1020 = vmatprep.subr.mxu0 0.0
  %1021 = vmatpush1.msra.mxu0 0.0
  %1022 = vmatprep.subr.mxu0 0.0
  %1023 = vmatpush1.msra.mxu0 %v985
  %1024 = vmatprep.subr.mxu0 0.0
  %1025 = vmatpush1.msra.mxu0 %v984
  %1026 = vmatprep.subr.mxu0 0.0
  %1027 = vmatpush1.msra.mxu0 %v983
  %1028 = vmatprep.subr.mxu0 0.0
  %1029 = vmatpush1.msra.mxu0 %v982
  %1030 = vmatprep.subr.mxu0 0.0
  %1031 = vmatpush2.msra.mxu0 0.0
  %1032 = vmatprep.subr.mxu0 0.0
  %1033 = vmatpush2.msra.mxu0 0.0
  %1034 = vmatprep.subr.mxu0 0.0
  %1035 = vmatpush2.msra.mxu0 0.0
  %1036 = vmatprep.subr.mxu0 0.0
  %1037 = vmatpush2.msra.mxu0 0.0
  %1038 = vmatprep.subr.mxu0 0.0
  %1039 = vmatpush2.msra.mxu0 0.0
  %1040 = vmatprep.subr.mxu0 0.0
  %1041 = vmatpush2.msra.mxu0 0.0
  %1042 = vmatprep.subr.mxu0 0.0
  %1043 = vmatpush2.msra.mxu0 0.0
  %1044 = vmatprep.subr.mxu0 0.0
  %1045 = vmatpush2.msra.mxu0 0.0
  %1046 = vmatprep.subr.mxu0 0.0
  %1047 = vmatpush2.msra.mxu0 0.0
  %1048 = vmatprep.subr.mxu0 0.0
  %1049 = vmatpush2.msra.mxu0 0.0
  %1050 = vmatprep.subr.mxu0 0.0
  %1051 = vmatpush2.msra.mxu0 0.0
  %1052 = vmatprep.subr.mxu0 0.0
  %1053 = vmatpush2.msra.mxu0 0.0
  %1054 = vmatprep.subr.mxu0 0.0
  %1055 = vmatpush2.msra.mxu0 0.0
  %1056 = vmatprep.subr.mxu0 0.0
  %1057 = vmatpush2.msra.mxu0 0.0
  %1058 = vmatprep.subr.mxu0 0.0
  %1059 = vmatpush2.msra.mxu0 0.0
  %1060 = vmatprep.subr.mxu0 0.0
  %1061 = vmatpush2.msra.mxu0 0.0
  %1062 = vmatprep.mubr.f32.mxu0 0.0
  %1063 = vmatmul.mubr.f32.gmra.mxu0 %v996
  %v1064 = vpop.f32.mrf.mxu0
  %v1065 = vadd.f32 %v991, %v1064
  %v1066 = vpop.f32.mrf.mxu0
  %1067 = vdwg.mxu0
  %1068 = vst [vmem:[%s5] sm:$0xff] %v1065
  // Predicated region
  $region22: #{forward.1} parent=0 // pred_check
    _
  $region23: #{forward.1} parent=0 // pred_check_branch
    %1070 = sbr.rel (0) target = $region25
  $region24: #{forward.1} parent=0 // pred_region
    _
  $region25: #{forward.1} parent=0 // pred_fallthru
    _
  // Predicated region
  $region26: #{forward.1} parent=0 // pred_check
    _
  $region27: #{forward.1} parent=0 // pred_check_branch
    %1072 = sbr.rel (0) target = $region29
  $region28: #{forward.1} parent=0 // pred_region
    _
  $region29: #{forward.1} parent=0 // pred_fallthru
    _

</llo_original>
